<compile_context>
chip_gen: v5e
topology: v5e:2x2
jax: 0.10.0
libtpu: 0.0.40
codegen_flags: <defaults>
</compile_context>

<pallas_src>
import jax
import jax.numpy as jnp
from jax.experimental import pallas as pl
from jax.experimental.pallas import tpu as pltpu

_LANE = 128
_TARGET_BLOCK_BYTES = 6 * 1024 * 1024   # ~6 MiB/block; 4x block + params ~26 MiB VMEM
_MAX_TILE_HW = 2048                     # lane-dense streaming plateau


def _sublane(itemsize):
    # f32 -> 8, bf16 -> 16, int8/fp8 -> 32 rows per packed vreg group.
    return max(8, 32 // max(1, itemsize))


def _round_up(x, m):
    return ((x + m - 1) // m) * m


def _standardize_kernel(x_ref, p_ref, o_ref):
    # x_ref: (TILE_R, TILE_HW); p_ref: (TILE_R, 2) f32 with [:,0]=mean, [:,1]=1/std.
    x = x_ref[...].astype(jnp.float32)
    mean = p_ref[:, 0:1]
    inv_std = p_ref[:, 1:2]
    o_ref[...] = ((x - mean) * inv_std).astype(o_ref.dtype)


def _pick_tiles(rows, hw, itemsize):
    """Pick (tile_r, tile_hw) obeying the (8*pack, 128) rule, ~6 MiB blocks."""
    sub = _sublane(itemsize)
    # Lane axis: full extent if small, else a multiple of 128 (hw is 128-aligned here).
    tile_hw = hw if hw <= _MAX_TILE_HW else _MAX_TILE_HW
    # Sublane axis: as many rows as the byte budget allows, multiple of `sub`.
    budget = max(sub, _TARGET_BLOCK_BYTES // max(1, tile_hw * itemsize))
    if rows <= budget:
        tile_r = rows                                   # full-dim block (always legal)
    else:
        tile_r = max(sub, (budget // sub) * sub)
    # v7x megacore: guarantee >= 2 grid steps when there is enough work.
    if pl.cdiv(rows, tile_r) * pl.cdiv(hw, tile_hw) < 2:
        if rows >= 2 * sub:
            tile_r = _round_up(pl.cdiv(rows, 2), sub)
        elif hw >= 2 * _LANE:
            tile_hw = _round_up(pl.cdiv(hw, 2), _LANE)
    return tile_r, tile_hw


def standardize(x, mean, std):
    """Pallas TPU forward of StandardizeLayer: (x - mean) / std.

    x: (N, C, H, W); mean/std: per-channel params broadcastable to (1, C, 1, 1).
    Note: 1/std is precomputed (differs from true divide by ~1 ulp); std == 0
    yields inf/nan exactly like the PyTorch divide would.
    """
    N, C, H, W = x.shape
    HW = H * W
    R = N * C
    itemsize = x.dtype.itemsize
    sub = _sublane(itemsize)

    # --- per-channel parameters, computed once in f32 on (C,)-sized data ---
    def _per_channel(p):
        p = jnp.asarray(p, jnp.float32)
        if p.size == C:
            return p.reshape(C)
        return jnp.broadcast_to(p, (1, C, 1, 1)).reshape(C)

    mean_c = _per_channel(mean)
    inv_std_c = 1.0 / _per_channel(std)      # reciprocal hoisted out of the hot loop

    # --- layout: flatten to a lane-dense 2D (rows, hw) slab. If N*C underfills
    # the packed sublanes, fold part of the spatial axis into rows (exact, since
    # mean/std are constant per channel); prefer folds that keep hw 128-aligned. ---
    fold = 1
    if R < sub:
        chosen = None
        for f in (2, 4, 8, 16, 32):
            if HW % f == 0 and R * f >= sub and (HW // f) % _LANE == 0:
                chosen = f
                break
        if chosen is None:
            for f in (2, 4, 8, 16, 32):
                if HW % f == 0 and R * f >= sub:
                    chosen = f
                    break
        if chosen is not None:
            fold = chosen
    rows = R * fold
    hw = HW // fold

    x2 = x.reshape(rows, hw)                                   # free row-major reshape

    # Ragged lane width: pad to a 128 multiple so stores are unmasked vst
    # (one extra HBM copy on this path only; aligned shapes take the fast path).
    hw_padded = _round_up(hw, _LANE)
    if hw_padded != hw:
        x2 = jnp.pad(x2, ((0, 0), (0, hw_padded - hw)))

    # Pack per-row params into one (rows, 2) operand: [:,0]=mean, [:,1]=1/std.
    mean_rows = jnp.repeat(jnp.tile(mean_c, N), fold)
    inv_rows = jnp.repeat(jnp.tile(inv_std_c, N), fold)
    params = jnp.stack([mean_rows, inv_rows], axis=-1)          # (rows, 2) f32

    tile_r, tile_hw = _pick_tiles(rows, hw_padded, itemsize)
    # Grid order (row_tiles, hw_tiles): hw innermost so the (tile_r, 2) param
    # block index is constant across inner steps and not re-DMA'd.
    grid = (pl.cdiv(rows, tile_r), pl.cdiv(hw_padded, tile_hw))

    # Explicit scoped-VMEM budget: 2x(in + out) blocks + 2x padded param block
    # + margin. Portable across the 16/32/32 MiB per-generation defaults.
    data_block = tile_r * tile_hw * itemsize
    param_block = _round_up(tile_r, 8) * _LANE * 4
    vmem_bytes = min(2 * (2 * data_block + param_block) + (2 << 20), 60 << 20)

    out2 = pl.pallas_call(
        _standardize_kernel,
        out_shape=jax.ShapeDtypeStruct((rows, hw_padded), x.dtype),
        grid_spec=pltpu.PrefetchScalarGridSpec(
            num_scalar_prefetch=0,
            grid=grid,
            in_specs=[
                pl.BlockSpec((tile_r, tile_hw), lambda r, h: (r, h)),
                pl.BlockSpec((tile_r, 2), lambda r, h: (r, 0)),
            ],
            out_specs=pl.BlockSpec((tile_r, tile_hw), lambda r, h: (r, h)),
        ),
        compiler_params=pltpu.CompilerParams(
            # Both axes are independent -> megacore sharding on v7x's 2 TCs.
            dimension_semantics=("parallel", "parallel"),
            vmem_limit_bytes=vmem_bytes),
    )(x2, params)

    if hw_padded != hw:
        out2 = out2[:, :hw]
    return out2.reshape(N, C, H, W)


if __name__ == "__main__":
    # Deterministic per-channel parameters, shape (1, C, 1, 1) as the module implies.
    N, C, H, W = 2, 4, 16, 16
    mean = (jnp.arange(C, dtype=jnp.float32) * 0.1 - 0.15).reshape(1, C, 1, 1)
    std = (0.5 + 0.25 * jnp.arange(C, dtype=jnp.float32)).reshape(1, C, 1, 1)

    key = jax.random.PRNGKey(0)
    x = jax.random.normal(key, (N, C, H, W), dtype=jnp.float32)

    out = jax.block_until_ready(standardize(x, mean, std))

    # Reference check in plain JAX (same semantics as the PyTorch forward).
    ref = (x - mean) / std
    assert out.shape == ref.shape and out.dtype == ref.dtype
    # multiply-by-precomputed-reciprocal differs from divide by ~1 ulp
    assert jnp.max(jnp.abs(out - ref)) < 1e-5

    print("KERNEL_OK")
</pallas_src>

<mosaic_0001>
module attributes {stable_mosaic.version = 11 : i64} {
  func.func @_standardize_kernel(%arg0: i32, %arg1: i32, %arg2: memref<8x128xf32, #tpu.memory_space<vmem>>, %arg3: memref<8x2xf32, #tpu.memory_space<vmem>>, %arg4: memref<8x128xf32, #tpu.memory_space<vmem>>) attributes {dimension_semantics = [#tpu.dimension_semantics<parallel>, #tpu.dimension_semantics<parallel>], iteration_bounds = array<i64: 1, 2>, scalar_prefetch = 0 : i64, scratch_operands = 0 : i64, tpu.core_type = #tpu.core_type<tc>, window_params = [{transform_indices = @transform_0, window_bounds = array<i64: 8, 128>}, {transform_indices = @transform_1, window_bounds = array<i64: 8, 2>}, {transform_indices = @transform_2, window_bounds = array<i64: 8, 128>}]} {
    %c0 = arith.constant 0 : index
    %c0_0 = arith.constant 0 : index
    %0 = vector.load %arg2[%c0, %c0_0] : memref<8x128xf32, #tpu.memory_space<vmem>>, vector<8x128xf32>
    %c0_1 = arith.constant 0 : index
    %c0_2 = arith.constant 0 : index
    %1 = vector.load %arg3[%c0_1, %c0_2] : memref<8x2xf32, #tpu.memory_space<vmem>>, vector<8x1xf32>
    %c0_3 = arith.constant 0 : index
    %c1 = arith.constant 1 : index
    %2 = vector.load %arg3[%c0_3, %c1] : memref<8x2xf32, #tpu.memory_space<vmem>>, vector<8x1xf32>
    %3 = vector.broadcast %1 : vector<8x1xf32> to vector<8x128xf32>
    %4 = arith.subf %0, %3 : vector<8x128xf32>
    %5 = vector.broadcast %2 : vector<8x1xf32> to vector<8x128xf32>
    %6 = arith.mulf %4, %5 : vector<8x128xf32>
    %c0_4 = arith.constant 0 : index
    %c0_5 = arith.constant 0 : index
    %7 = vector.load %arg4[%c0_4, %c0_5] : memref<8x128xf32, #tpu.memory_space<vmem>>, vector<8x128xf32>
    tpu.vector_store %arg4[%c0_4, %c0_5], %6 {strides = array<i32>} : memref<8x128xf32, #tpu.memory_space<vmem>>, vector<8x128xf32>,
    return
  }
  func.func @transform_0(%arg0: i32, %arg1: i32) -> (i32, i32) {
    %c0_i32 = arith.constant 0 : i32
    return %arg0, %arg1 : i32, i32
  }
  func.func @transform_1(%arg0: i32, %arg1: i32) -> (i32, i32) {
    %c0_i32 = arith.constant 0 : i32
    %c0_i32_0 = arith.constant 0 : i32
    return %arg0, %c0_i32 : i32, i32
  }
  func.func @transform_2(%arg0: i32, %arg1: i32) -> (i32, i32) {
    %c0_i32 = arith.constant 0 : i32
    return %arg0, %arg1 : i32, i32
  }
}

</mosaic_0001>

<llo_original>
// kernel: tpu_custom_call.1
$region0: #{tpu_custom_call.1}
  #allocation0 [shape = 'u32[]', space=smem, size = 0x4, offset = 0x4, fixed_abs, tag = 'smem constant byte address 0x4 - core index']
  #allocation1 [shape = 'u32[72,128]{1,0:T(1,128)}', space=vmem, size = 0x9000, scoped, tag = 'internal scratch']
  %s0 = inlined_call_operand.hbm [shape: f32[8,256], index: 0, kind: input, shape index: {}]
  %s1 = inlined_call_operand.vmem [shape: f32[8,2], index: 1, kind: input, shape index: {}]
  %s2 = inlined_call_operand.hbm [shape: f32[8,256], index: 2, kind: output, shape index: {}]
  %s3 = sld [smem:[#allocation0]]
  $region45: #{tpu_custom_call.1} parent=0
    _
  %s5 = ssub.s32 1, %s3
  %s6 = scalar_select 0, %s5, %s3
  $region1: #{tpu_custom_call.1} parent=0
    #allocation2 [shape = 'u8[8192]{0}', space=vmem, size = 0x2000, scoped, tag = 'input window, operand 0']
    #allocation3 [shape = 's32[2]{0}', space=sflag, size = 0x8, scoped, tag = 'scoped memory for tpu_custom_call.1']
    #allocation4 [shape = 's32[2]{0}', space=sflag, size = 0x8, scoped, tag = 'scoped memory for tpu_custom_call.1']
    #allocation5 [shape = 'u8[8192]{0}', space=vmem, size = 0x2000, scoped, tag = 'output window, operand 0']
    %7 = vsyncpa [#allocation3], 0
    %s8 = scalar_lea.sflag [#allocation3], 1
    %9 = vsyncpa %s8, 0
    %10 = vsyncpa [#allocation4], 0
    %s11 = scalar_lea.sflag [#allocation4], 1
    %12 = vsyncpa %s11, 0
    loop: start=0, step=1, limit=4
    $region2: #{tpu_custom_call.1} parent=1 // loop_pre_header
      _
    $region3: #{tpu_custom_call.1} parent=1 // loop_header
      %s14 = sphi 0, %s18
      %p15 = scmp.ge.s32.totalorder %s14, 4
      %s21 = sphi 0, %s33
      %s22 = sphi 0, %s29
      %s23 = sphi 0, %s21
      %s24 = sphi 0, %s22
      %s25 = sphi 0, %s23
      %s26 = sphi 0, %s24
      %s38 = sphi 0, %s40
      %s41 = sphi 0, %s38
      %s42 = sphi 0, %s41
      %s58 = sphi 0, %s42
      %s64 = sphi 0, %s66
      %s67 = sphi 0, %s64
      %s68 = sphi 0, %s67
      %s84 = sphi 0, %s68
      %s92 = sphi 0, %s94
      %s95 = sphi 0, %s92
      %s96 = sphi 0, %s95
      %s112 = sphi 0, %s96
    $region4: #{tpu_custom_call.1} parent=1 // loop_header_branch
      %17 = sbr.rel (%p15) target = $region8
    $region5: #{tpu_custom_call.1} parent=1 // loop_body
      %s19 = ssub.s32 %s14, 1
      %s20 = ssub.s32 %s14, 2
      %s27 = sadd.s32 1, %s22
      %p28 = scmp.ge.s32.totalorder %s27, 2
      %s29 = scalar_select %p28, 0, %s27
      %s30 = sadd.s32 1, %s21
      %s31 = scalar_select %p28, %s30, %s21
      %p32 = scmp.ge.s32.totalorder %s31, 1
      %s33 = scalar_select %p32, 0, %s31
      %s34 = ssub.s32 %s21, %s33
      %s35 = ssub.s32 %s22, %s29
      %s36 = sor.u32 %s34, %s35
      %p37 = scmp.eq.s32.totalorder %s36, 0
      %s39 = sadd.s32 %s38, 1
      %s40 = scalar_select %p37, %s38, %s39
      %p43 = pneg %p37
      %p44 = scmp.eq.s32.totalorder %s14, 1
      %p45 = por %p43, %p44
      %p46 = scmp.ne.s32.totalorder %s38, %s41
      %p47 = scmp.eq.s32.totalorder %s14, 0
      %p48 = por %p46, %p47
      %p49 = scmp.ne.s32.totalorder %s38, %s41
      %p50 = scmp.eq.s32.totalorder %s19, 1
      %p51 = por %p49, %p50
      %p52 = scmp.ne.s32.totalorder %s41, %s42
      %p53 = scmp.eq.s32.totalorder %s19, 0
      %p54 = por %p52, %p53
      %p55 = scmp.ne.s32.totalorder %s41, %s42
      %p56 = scmp.eq.s32.totalorder %s20, 1
      %p57 = por %p55, %p56
      %p59 = scmp.ne.s32.totalorder %s42, %s58
      %p60 = scmp.eq.s32.totalorder %s20, 0
      %p61 = por %p59, %p60
      %s62 = ssub.s32 %s21, %s33
      %p63 = scmp.eq.s32.totalorder %s62, 0
      %s65 = sadd.s32 %s64, 1
      %s66 = scalar_select %p63, %s64, %s65
      %p69 = pneg %p63
      %p70 = scmp.eq.s32.totalorder %s14, 1
      %p71 = por %p69, %p70
      %p72 = scmp.ne.s32.totalorder %s64, %s67
      %p73 = scmp.eq.s32.totalorder %s14, 0
      %p74 = por %p72, %p73
      %p75 = scmp.ne.s32.totalorder %s64, %s67
      %p76 = scmp.eq.s32.totalorder %s19, 1
      %p77 = por %p75, %p76
      %p78 = scmp.ne.s32.totalorder %s67, %s68
      %p79 = scmp.eq.s32.totalorder %s19, 0
      %p80 = por %p78, %p79
      %p81 = scmp.ne.s32.totalorder %s67, %s68
      %p82 = scmp.eq.s32.totalorder %s20, 1
      %p83 = por %p81, %p82
      %p85 = scmp.ne.s32.totalorder %s68, %s84
      %p86 = scmp.eq.s32.totalorder %s20, 0
      %p87 = por %p85, %p86
      %s88 = ssub.s32 %s21, %s33
      %s89 = ssub.s32 %s22, %s29
      %s90 = sor.u32 %s88, %s89
      %p91 = scmp.eq.s32.totalorder %s90, 0
      %s93 = sadd.s32 %s92, 1
      %s94 = scalar_select %p91, %s92, %s93
      %p97 = pneg %p91
      %p98 = scmp.eq.s32.totalorder %s14, 1
      %p99 = por %p97, %p98
      %p100 = scmp.ne.s32.totalorder %s92, %s95
      %p101 = scmp.eq.s32.totalorder %s14, 0
      %p102 = por %p100, %p101
      %p103 = scmp.ne.s32.totalorder %s92, %s95
      %p104 = scmp.eq.s32.totalorder %s19, 1
      %p105 = por %p103, %p104
      %p106 = scmp.ne.s32.totalorder %s95, %s96
      %p107 = scmp.eq.s32.totalorder %s19, 0
      %p108 = por %p106, %p107
      %p109 = scmp.ne.s32.totalorder %s95, %s96
      %p110 = scmp.eq.s32.totalorder %s20, 1
      %p111 = por %p109, %p110
      %p113 = scmp.ne.s32.totalorder %s96, %s112
      %p114 = scmp.eq.s32.totalorder %s20, 0
      %p115 = por %p113, %p114
      %p116 = scmp.le.s32.totalorder 1, %s14
      %p117 = scmp.lt.s32.totalorder %s14, 3
      %p118 = pnand %p116, %p117
      %p119 = pneg %p118
      // Predicated region
      $region9: #{tpu_custom_call.1} parent=5 // pred_check
        _
      $region10: #{tpu_custom_call.1} parent=5 // pred_check_branch
        %121 = sbr.rel (%p118) target = $region12
      $region11: #{tpu_custom_call.1} parent=5 // pred_region
        %s122 = ssub.s32 %s14, 1
        // Predicated region
        $region13: #{tpu_custom_call.1} parent=11 // pred_check
          %p123 = pneg %p80
        $region14: #{tpu_custom_call.1} parent=11 // pred_check_branch
          %125 = sbr.rel (%p123) target = $region16
        $region15: #{tpu_custom_call.1} parent=11 // pred_region
          %p126 = scmp.lt.s32.totalorder %s23, 0
          %s127 = scalar_select %p126, %s23, 0
          %s128 = smul.addr %s127, 8
          %s129 = scalar_lea.vmem %s1, %s128
        $region16: #{tpu_custom_call.1} parent=11 // pred_fallthru
          _
      $region12: #{tpu_custom_call.1} parent=5 // pred_fallthru
        _
      %p130 = scmp.lt.s32.totalorder %s14, 2
      // Predicated region
      $region17: #{tpu_custom_call.1} parent=5 // pred_check
        %p131 = pneg %p130
      $region18: #{tpu_custom_call.1} parent=5 // pred_check_branch
        %133 = sbr.rel (%p131) target = $region20
      $region19: #{tpu_custom_call.1} parent=5 // pred_region
        // Predicated region
        $region21: #{tpu_custom_call.1} parent=19 // pred_check
          %p134 = pneg %p48
        $region22: #{tpu_custom_call.1} parent=19 // pred_check_branch
          %136 = sbr.rel (%p134) target = $region24
        $region23: #{tpu_custom_call.1} parent=19 // pred_region
          %s137 = sand.u32 %s38, 1
          %s138 = scalar_lea.sflag [#allocation3], %s137
          %s139 = sand.u32 %s38, 1
          %s140 = smul.addr %s139, 8
          %s141 = scalar_lea.vmem [#allocation2], %s140
          %143 = vsyncadd %s138, 0
          %s144 = smul.addr %s21, 2
          %s145 = sadd.s32 %s22, %s144
          %s146 = smul.addr %s145, 8
          %s147 = scalar_lea.hbm %s0, %s146
          %s149 = sshll.u32 %s147, 4
          %s150 = int_to_ptr.hbm [resolvable:$true] %s149
          %s151 = sshll.u32 %s141, 4
          %s152 = int_to_ptr.vmem [resolvable:$true] %s151
          %154 = dma.hbm_to_vmem [thread:$0]  %s150, 128, %s152, %s138
        $region24: #{tpu_custom_call.1} parent=19 // pred_fallthru
          _
      $region20: #{tpu_custom_call.1} parent=5 // pred_fallthru
        _
      %p155 = scmp.le.s32.totalorder 1, %s14
      %p156 = scmp.lt.s32.totalorder %s14, 3
      %p157 = pnand %p155, %p156
      %p158 = pneg %p157
      // Predicated region
      $region25: #{tpu_custom_call.1} parent=5 // pred_check
        _
      $region26: #{tpu_custom_call.1} parent=5 // pred_check_branch
        %160 = sbr.rel (%p157) target = $region28
      $region27: #{tpu_custom_call.1} parent=5 // pred_region
        %s161 = ssub.s32 %s14, 1
        %s162 = sand.u32 %s41, 1
        %s163 = scalar_lea.sflag [#allocation3], %s162
        %s164 = sand.u32 %s41, 1
        %s165 = smul.addr %s164, 8
        %s166 = scalar_lea.vmem [#allocation2], %s165
        // Predicated region
        $region29: #{tpu_custom_call.1} parent=27 // pred_check
          %p167 = pneg %p54
        $region30: #{tpu_custom_call.1} parent=27 // pred_check_branch
          %169 = sbr.rel (%p167) target = $region32
        $region31: #{tpu_custom_call.1} parent=27 // pred_region
          %171 = dma.done %s163, 128
        $region32: #{tpu_custom_call.1} parent=27 // pred_fallthru
          _
        %s172 = sand.u32 %s41, 1
        %s173 = scalar_lea.sflag [#allocation3], %s172
        %s174 = sand.u32 %s41, 1
        %s175 = smul.addr %s174, 8
        %s176 = scalar_lea.vmem [#allocation2], %s175
        %p177 = pneg %p54
        %p178 = pneg %p51
        %p179 = scmp.lt.s32.totalorder %s23, 0
        %s180 = scalar_select %p179, %s23, 0
        %s181 = smul.addr %s180, 8
        %s182 = scalar_lea.vmem %s1, %s181
        %p183 = pneg %p80
        %p184 = pneg %p77
        %p185 = pneg %p108
        %p186 = pneg %p105
        %s187 = sand.u32 %s95, 1
        %s188 = scalar_lea.sflag [#allocation4], %s187
        %s189 = sand.u32 %s95, 1
        %s190 = smul.addr %s189, 8
        %s191 = scalar_lea.vmem [#allocation5], %s190
        %p192 = scmp.lt.s32.totalorder %s23, 0
        %s193 = scalar_select %p192, %s23, 0
        %s194 = smul.addr %s193, 8
        %s195 = scalar_lea.vmem %s1, %s194
        %v196 = vld [vmem:[%s166] sm:$0xff]
        %v197 = vld [vmem:[%s195] sm:$0xff]
        %199 = vset.pattern.permute.xlu0 0
        %200 = vperm.xlu0 %199, %v197
        %v201 = vpop.permute.xlu0 %200
        %v203 = vsub.f32 %v196, %v201
        %204 = vset.pattern.permute.xlu0 1
        %205 = vperm.xlu0 %204, %v197
        %v206 = vpop.permute.xlu0 %205
        %v208 = vmul.f32 %v203, %v206
        %209 = vst [vmem:[%s191] sm:$0xff] %v208
        %s210 = sand.u32 %s95, 1
        %s211 = scalar_lea.sflag [#allocation4], %s210
        %s212 = sand.u32 %s95, 1
        %s213 = smul.addr %s212, 8
        %s214 = scalar_lea.vmem [#allocation5], %s213
        // Predicated region
        $region33: #{tpu_custom_call.1} parent=27 // pred_check
          %p215 = pneg %p105
        $region34: #{tpu_custom_call.1} parent=27 // pred_check_branch
          %217 = sbr.rel (%p215) target = $region36
        $region35: #{tpu_custom_call.1} parent=27 // pred_region
          %219 = vsyncadd %s211, 0
          %s220 = smul.addr %s23, 2
          %s221 = sadd.s32 %s24, %s220
          %s222 = smul.addr %s221, 8
          %s223 = scalar_lea.hbm %s2, %s222
          %s225 = sshll.u32 %s214, 4
          %s226 = int_to_ptr.vmem [resolvable:$true] %s225
          %s227 = sshll.u32 %s223, 4
          %s228 = int_to_ptr.hbm [resolvable:$true] %s227
          %230 = dma.vmem_to_hbm [thread:$0]  %s226, 128, %s228, %s211
        $region36: #{tpu_custom_call.1} parent=27 // pred_fallthru
          _
      $region28: #{tpu_custom_call.1} parent=5 // pred_fallthru
        _
      %p231 = scmp.le.s32.totalorder 2, %s14
      // Predicated region
      $region37: #{tpu_custom_call.1} parent=5 // pred_check
        %p232 = pneg %p231
      $region38: #{tpu_custom_call.1} parent=5 // pred_check_branch
        %234 = sbr.rel (%p232) target = $region40
      $region39: #{tpu_custom_call.1} parent=5 // pred_region
        %s235 = ssub.s32 %s14, 2
        // Predicated region
        $region41: #{tpu_custom_call.1} parent=39 // pred_check
          %p236 = pneg %p111
        $region42: #{tpu_custom_call.1} parent=39 // pred_check_branch
          %238 = sbr.rel (%p236) target = $region44
        $region43: #{tpu_custom_call.1} parent=39 // pred_region
          %s239 = sand.u32 %s96, 1
          %s240 = scalar_lea.sflag [#allocation4], %s239
          %s241 = sand.u32 %s96, 1
          %s242 = smul.addr %s241, 8
          %s243 = scalar_lea.vmem [#allocation5], %s242
          %245 = dma.done %s240, 128
        $region44: #{tpu_custom_call.1} parent=39 // pred_fallthru
          _
      $region40: #{tpu_custom_call.1} parent=5 // pred_fallthru
        _
    $region6: #{tpu_custom_call.1} parent=1 // loop_footer
      %s18 = sadd.s32 1, %s14
    $region7: #{tpu_custom_call.1} parent=1 // loop_footer_branch
      %13 = sbr.rel target = $region3
    $region8: #{tpu_custom_call.1} parent=1 // loop_exit
      _
    %246 = vsyncpa [#allocation3], 1
    %s247 = scalar_lea.sflag [#allocation3], 1
    %248 = vsyncpa %s247, 1
    %249 = vsyncpa [#allocation4], 1
    %s250 = scalar_lea.sflag [#allocation4], 1
    %251 = vsyncpa %s250, 1

</llo_original>
